<compile_context>
chip_gen: v7x
topology: tpu7x:2x2x1
jax: 0.10.0
libtpu: 0.0.40
codegen_flags: <defaults>
</compile_context>

<pallas_src>
import functools

import jax
import jax.numpy as jnp
from jax import lax
from jax.experimental import pallas as pl
from jax.experimental.pallas import tpu as pltpu


# ---------------------------------------------------------------------------
# Pallas kernels: tiled matmul with fused BN-affine / LeakyReLU / residual.
# ---------------------------------------------------------------------------

def _mm_bn_act_kernel(x_ref, w_ref, scale_ref, shift_ref, o_ref, acc_ref,
                      *, slope, out_scale):
    @pl.when(pl.program_id(2) == 0)
    def _():
        acc_ref[...] = jnp.zeros_like(acc_ref)

    acc_ref[...] += jnp.dot(x_ref[...], w_ref[...],
                            preferred_element_type=jnp.float32)

    @pl.when(pl.program_id(2) == pl.num_programs(2) - 1)
    def _():
        y = acc_ref[...] * scale_ref[...] + shift_ref[...]
        if slope != 1.0:                       # static: traced once
            y = jnp.where(y >= 0, y, slope * y)
        if out_scale != 1.0:
            y = y * out_scale
        o_ref[...] = y.astype(o_ref.dtype)


def _mm_bn_act_res_kernel(x_ref, w_ref, scale_ref, shift_ref, res_ref, o_ref,
                          acc_ref, *, slope, out_scale):
    @pl.when(pl.program_id(2) == 0)
    def _():
        acc_ref[...] = jnp.zeros_like(acc_ref)

    acc_ref[...] += jnp.dot(x_ref[...], w_ref[...],
                            preferred_element_type=jnp.float32)

    @pl.when(pl.program_id(2) == pl.num_programs(2) - 1)
    def _():
        y = acc_ref[...] * scale_ref[...] + shift_ref[...]
        if slope != 1.0:
            y = jnp.where(y >= 0, y, slope * y)
        y = (y + res_ref[...].astype(jnp.float32)) * out_scale
        o_ref[...] = y.astype(o_ref.dtype)


def _pick_tile(dim, max_tile, quantum):
    """Largest multiple of `quantum` that divides `dim` and is <= max_tile,
    else the full dim (always legal: block == full array extent)."""
    if dim <= max_tile:
        return dim
    best = None
    t = quantum
    while t <= max_tile:
        if dim % t == 0:
            best = t
        t += quantum
    return best if best is not None else dim


def _fused_conv_matmul(x, w, scale, shift, *, slope, out_scale=1.0,
                       residual=None, max_tm=256, max_tn=256, max_tk=1024):
    """out = act((x @ w) * scale + shift); act = LeakyReLU(slope) (slope=1 -> id);
    optionally out = (act(...) + residual) * out_scale.  Shapes:
    x (M, K), w (K, N), scale/shift (N,), residual (M, N)."""
    M, K = x.shape
    K2, N = w.shape
    assert K == K2
    tm = _pick_tile(M, max_tm, 8)
    tn = _pick_tile(N, max_tn, 128)
    tk = _pick_tile(K, max_tk, 128)
    grid = (M // tm, N // tn, K // tk)

    scale2 = scale.reshape(1, N).astype(jnp.float32)
    shift2 = shift.reshape(1, N).astype(jnp.float32)

    in_specs = [
        pl.BlockSpec((tm, tk), lambda i, j, k: (i, k)),
        pl.BlockSpec((tk, tn), lambda i, j, k: (k, j)),
        pl.BlockSpec((1, tn), lambda i, j, k: (0, j)),
        pl.BlockSpec((1, tn), lambda i, j, k: (0, j)),
    ]
    args = [x, w, scale2, shift2]
    if residual is None:
        kernel = functools.partial(_mm_bn_act_kernel,
                                   slope=slope, out_scale=out_scale)
    else:
        in_specs.append(pl.BlockSpec((tm, tn), lambda i, j, k: (i, j)))
        args.append(residual)
        kernel = functools.partial(_mm_bn_act_res_kernel,
                                   slope=slope, out_scale=out_scale)

    return pl.pallas_call(
        kernel,
        out_shape=jax.ShapeDtypeStruct((M, N), x.dtype),
        grid_spec=pltpu.PrefetchScalarGridSpec(
            num_scalar_prefetch=0,
            grid=grid,
            in_specs=in_specs,
            out_specs=pl.BlockSpec((tm, tn), lambda i, j, k: (i, j)),
            scratch_shapes=[pltpu.VMEM((tm, tn), jnp.float32)],
        ),
        compiler_params=pltpu.CompilerParams(
            dimension_semantics=("parallel", "parallel", "arbitrary"),
        ),
    )(*args)


# ---------------------------------------------------------------------------
# Wrapper-side layout / parameter plumbing (no per-element compute here).
# ---------------------------------------------------------------------------

def _im2col(x_nhwc, kh, kw, stride, pad):
    """x (B,H,W,C) -> patches (B*Ho*Wo, kh*kw*C), taps row-major over (i,j)."""
    B, H, W, C = x_nhwc.shape
    xp = jnp.pad(x_nhwc, ((0, 0), (pad, pad), (pad, pad), (0, 0)))
    Ho = (H + 2 * pad - kh) // stride + 1
    Wo = (W + 2 * pad - kw) // stride + 1
    taps = []
    for i in range(kh):
        for j in range(kw):
            taps.append(xp[:, i:i + stride * Ho:stride,
                           j:j + stride * Wo:stride, :])
    p = jnp.concatenate(taps, axis=-1)          # (B, Ho, Wo, kh*kw*C)
    return p.reshape(B * Ho * Wo, kh * kw * C), Ho, Wo


def _weight_to_matrix(w_oihw):
    """(O, I, kh, kw) -> (kh*kw*I, O), matching _im2col tap layout."""
    O = w_oihw.shape[0]
    return jnp.transpose(w_oihw, (2, 3, 1, 0)).reshape(-1, O)


def _spectral_normalize(w, n_iter=20):
    """Divide w by the largest singular value of w.view(O, -1) (power iter)."""
    w2d = w.reshape(w.shape[0], -1)
    v = jnp.ones((w2d.shape[1],), w.dtype) / jnp.sqrt(float(w2d.shape[1]))
    u = jnp.ones((w2d.shape[0],), w.dtype) / jnp.sqrt(float(w2d.shape[0]))
    for _ in range(n_iter):
        u = w2d @ v
        u = u / (jnp.linalg.norm(u) + 1e-12)
        v = w2d.T @ u
        v = v / (jnp.linalg.norm(v) + 1e-12)
    sigma = u @ (w2d @ v)
    return w / sigma


def _bn_fold(bn, eps=1e-5):
    scale = bn["gamma"] / jnp.sqrt(bn["var"] + eps)
    shift = bn["beta"] - bn["mean"] * scale
    return scale, shift


def down_block_comp(feat, params):
    """feat: (B, Cin, H, W) NCHW float32 -> (B, Cout, H/2, W/2)."""
    B, Cin, H, W = feat.shape
    Cout = params["w1"].shape[0]
    x_nhwc = jnp.transpose(feat, (0, 2, 3, 1))

    # --- main path, conv1: 4x4 stride 2 pad 1, fused BN + LeakyReLU(0.2) ---
    w1 = _spectral_normalize(params["w1"])
    p1, Ho, Wo = _im2col(x_nhwc, 4, 4, 2, 1)
    s1, b1 = _bn_fold(params["bn1"])
    y = _fused_conv_matmul(p1, _weight_to_matrix(w1), s1, b1, slope=0.2)
    y_nhwc = y.reshape(B, Ho, Wo, Cout)

    # --- direct path: AvgPool(2,2) + conv1x1 folded into 2x2-s2 conv, + BN ---
    wd = _spectral_normalize(params["wd"])                  # (Cout, Cin, 1, 1)
    wd_2x2 = jnp.broadcast_to(wd, (Cout, Cin, 2, 2)) * 0.25
    pd, _, _ = _im2col(x_nhwc, 2, 2, 2, 0)
    s3, b3 = _bn_fold(params["bn3"])
    direct = _fused_conv_matmul(pd, _weight_to_matrix(wd_2x2), s3, b3,
                                slope=1.0)                  # BN only, no act

    # --- main path, conv2: 3x3 s1 p1, fused BN + LReLU + residual + /1.2 ----
    w2 = _spectral_normalize(params["w2"])
    p2, _, _ = _im2col(y_nhwc, 3, 3, 1, 1)
    s2, b2 = _bn_fold(params["bn2"])
    out_flat = _fused_conv_matmul(p2, _weight_to_matrix(w2), s2, b2,
                                  slope=0.2, out_scale=1.0 / 1.2,
                                  residual=direct)

    return jnp.transpose(out_flat.reshape(B, Ho, Wo, Cout), (0, 3, 1, 2))


# ---------------------------------------------------------------------------
# Pure-JAX reference of the PyTorch module (eval-mode BN), for verification.
# ---------------------------------------------------------------------------

def _ref_forward(feat, params):
    def conv(x, w, stride, pad):
        return lax.conv_general_dilated(
            x, w, (stride, stride), [(pad, pad), (pad, pad)],
            dimension_numbers=("NCHW", "OIHW", "NCHW"),
            precision=lax.Precision.HIGHEST)

    def bn(x, p, eps=1e-5):
        scale = p["gamma"] / jnp.sqrt(p["var"] + eps)
        shift = p["beta"] - p["mean"] * scale
        return x * scale[None, :, None, None] + shift[None, :, None, None]

    def lrelu(x, s=0.2):
        return jnp.where(x >= 0, x, s * x)

    w1 = _spectral_normalize(params["w1"])
    w2 = _spectral_normalize(params["w2"])
    wd = _spectral_normalize(params["wd"])

    m = lrelu(bn(conv(feat, w1, 2, 1), params["bn1"]))
    m = lrelu(bn(conv(m, w2, 1, 1), params["bn2"]))

    B, C, H, W = feat.shape
    pooled = feat.reshape(B, C, H // 2, 2, W // 2, 2).mean(axis=(3, 5))
    d = bn(conv(pooled, wd, 1, 0), params["bn3"])
    return (m + d) / 1.2


# ---------------------------------------------------------------------------

def _make_bn(key, c):
    k1, k2, k3, k4 = jax.random.split(key, 4)
    return dict(
        gamma=1.0 + 0.1 * jax.random.normal(k1, (c,), jnp.float32),
        beta=0.1 * jax.random.normal(k2, (c,), jnp.float32),
        mean=0.1 * jax.random.normal(k3, (c,), jnp.float32),
        var=1.0 + 0.2 * jax.random.uniform(k4, (c,), jnp.float32),
    )


if __name__ == "__main__":
    key = jax.random.PRNGKey(0)
    ks = jax.random.split(key, 8)

    B, Cin, Cout, H, W = 2, 4, 8, 16, 16
    feat = jax.random.normal(ks[0], (B, Cin, H, W), jnp.float32)

    params = dict(
        w1=0.1 * jax.random.normal(ks[1], (Cout, Cin, 4, 4), jnp.float32),
        w2=0.1 * jax.random.normal(ks[2], (Cout, Cout, 3, 3), jnp.float32),
        wd=0.1 * jax.random.normal(ks[3], (Cout, Cin, 1, 1), jnp.float32),
        bn1=_make_bn(ks[4], Cout),
        bn2=_make_bn(ks[5], Cout),
        bn3=_make_bn(ks[6], Cout),
    )

    out = down_block_comp(feat, params)
    out = jax.block_until_ready(out)
    assert out.shape == (B, Cout, H // 2, W // 2), out.shape

    ref = jax.block_until_ready(_ref_forward(feat, params))
    assert jnp.allclose(out, ref, atol=2e-2, rtol=2e-2), (
        float(jnp.max(jnp.abs(out - ref))))

    print("KERNEL_OK")
</pallas_src>

<mosaic_0001>
module attributes {stable_mosaic.version = 11 : i64} {
  func.func @_mm_bn_act_kernel(%arg0: i32, %arg1: i32, %arg2: i32, %arg3: memref<128x64xf32, #tpu.memory_space<vmem>>, %arg4: memref<64x8xf32, #tpu.memory_space<vmem>>, %arg5: memref<1x8xf32, #tpu.memory_space<vmem>>, %arg6: memref<1x8xf32, #tpu.memory_space<vmem>>, %arg7: memref<128x8xf32, #tpu.memory_space<vmem>>, %arg8: memref<128x8xf32, #tpu.memory_space<vmem>>) attributes {dimension_semantics = [#tpu.dimension_semantics<parallel>, #tpu.dimension_semantics<parallel>, #tpu.dimension_semantics<arbitrary>], iteration_bounds = array<i64: 1, 1, 1>, scalar_prefetch = 0 : i64, scratch_operands = 1 : i64, tpu.core_type = #tpu.core_type<tc>, window_params = [{transform_indices = @transform_0, window_bounds = array<i64: 128, 64>}, {transform_indices = @transform_1, window_bounds = array<i64: 64, 8>}, {transform_indices = @transform_2, window_bounds = array<i64: 1, 8>}, {transform_indices = @transform_3, window_bounds = array<i64: 1, 8>}, {transform_indices = @transform_4, window_bounds = array<i64: 128, 8>}]} {
    %c0_i32 = arith.constant 0 : i32
    %0 = arith.cmpi eq, %arg2, %c0_i32 : i32
    %1 = arith.extui %0 : i1 to i32
    %c0_i32_0 = arith.constant 0 : i32
    %2 = arith.cmpi ne, %1, %c0_i32_0 : i32
    scf.if %2 {
      %cst_10 = arith.constant 0.000000e+00 : f32
      %12 = vector.broadcast %cst_10 : f32 to vector<128x8xf32>
      %c0_11 = arith.constant 0 : index
      %c0_12 = arith.constant 0 : index
      %13 = vector.load %arg8[%c0_11, %c0_12] : memref<128x8xf32, #tpu.memory_space<vmem>>, vector<128x8xf32>
      tpu.vector_store %arg8[%c0_11, %c0_12], %12 {strides = array<i32>} : memref<128x8xf32, #tpu.memory_space<vmem>>, vector<128x8xf32>,
    } else {
    }
    %c0 = arith.constant 0 : index
    %c0_1 = arith.constant 0 : index
    %3 = vector.load %arg8[%c0, %c0_1] : memref<128x8xf32, #tpu.memory_space<vmem>>, vector<128x8xf32>
    %c0_2 = arith.constant 0 : index
    %c0_3 = arith.constant 0 : index
    %4 = vector.load %arg3[%c0_2, %c0_3] : memref<128x64xf32, #tpu.memory_space<vmem>>, vector<128x64xf32>
    %c0_4 = arith.constant 0 : index
    %c0_5 = arith.constant 0 : index
    %5 = vector.load %arg4[%c0_4, %c0_5] : memref<64x8xf32, #tpu.memory_space<vmem>>, vector<64x8xf32>
    %cst = arith.constant dense<0.000000e+00> : vector<128x8xf32>
    %6 = tpu.matmul %4, %5, %cst {dimension_numbers = #tpu.dot_dimension_numbers<[1], [0], [0], [1], [0, 0, 1, 1], [], []>} : vector<128x64xf32>, vector<64x8xf32>, vector<128x8xf32> -> vector<128x8xf32>
    %7 = arith.addf %3, %6 : vector<128x8xf32>
    %c0_6 = arith.constant 0 : index
    %c0_7 = arith.constant 0 : index
    %8 = vector.load %arg8[%c0_6, %c0_7] : memref<128x8xf32, #tpu.memory_space<vmem>>, vector<128x8xf32>
    tpu.vector_store %arg8[%c0_6, %c0_7], %7 {strides = array<i32>} : memref<128x8xf32, #tpu.memory_space<vmem>>, vector<128x8xf32>,
    %c0_i32_8 = arith.constant 0 : i32
    %9 = arith.cmpi eq, %arg2, %c0_i32_8 : i32
    %10 = arith.extui %9 : i1 to i32
    %c0_i32_9 = arith.constant 0 : i32
    %11 = arith.cmpi ne, %10, %c0_i32_9 : i32
    scf.if %11 {
      %c0_10 = arith.constant 0 : index
      %c0_11 = arith.constant 0 : index
      %12 = vector.load %arg8[%c0_10, %c0_11] : memref<128x8xf32, #tpu.memory_space<vmem>>, vector<128x8xf32>
      %c0_12 = arith.constant 0 : index
      %c0_13 = arith.constant 0 : index
      %13 = vector.load %arg5[%c0_12, %c0_13] : memref<1x8xf32, #tpu.memory_space<vmem>>, vector<1x8xf32>
      %14 = vector.broadcast %13 : vector<1x8xf32> to vector<128x8xf32>
      %15 = arith.mulf %12, %14 : vector<128x8xf32>
      %c0_14 = arith.constant 0 : index
      %c0_15 = arith.constant 0 : index
      %16 = vector.load %arg6[%c0_14, %c0_15] : memref<1x8xf32, #tpu.memory_space<vmem>>, vector<1x8xf32>
      %17 = vector.broadcast %16 : vector<1x8xf32> to vector<128x8xf32>
      %18 = arith.addf %15, %17 : vector<128x8xf32>
      %cst_16 = arith.constant 0.000000e+00 : f32
      %19 = vector.broadcast %cst_16 : f32 to vector<128x8xf32>
      %20 = arith.cmpf oge, %18, %19 : vector<128x8xf32>
      %cst_17 = arith.constant 2.000000e-01 : f32
      %21 = vector.broadcast %cst_17 : f32 to vector<128x8xf32>
      %22 = arith.mulf %21, %18 : vector<128x8xf32>
      %23 = arith.select %20, %18, %22 : vector<128x8xi1>, vector<128x8xf32>
      %c0_18 = arith.constant 0 : index
      %c0_19 = arith.constant 0 : index
      %24 = vector.load %arg7[%c0_18, %c0_19] : memref<128x8xf32, #tpu.memory_space<vmem>>, vector<128x8xf32>
      tpu.vector_store %arg7[%c0_18, %c0_19], %23 {strides = array<i32>} : memref<128x8xf32, #tpu.memory_space<vmem>>, vector<128x8xf32>,
    } else {
    }
    return
  }
  func.func @transform_0(%arg0: i32, %arg1: i32, %arg2: i32) -> (i32, i32) {
    %c0_i32 = arith.constant 0 : i32
    return %arg0, %arg2 : i32, i32
  }
  func.func @transform_1(%arg0: i32, %arg1: i32, %arg2: i32) -> (i32, i32) {
    %c0_i32 = arith.constant 0 : i32
    return %arg2, %arg1 : i32, i32
  }
  func.func @transform_2(%arg0: i32, %arg1: i32, %arg2: i32) -> (i32, i32) {
    %c0_i32 = arith.constant 0 : i32
    %c0_i32_0 = arith.constant 0 : i32
    return %c0_i32, %arg1 : i32, i32
  }
  func.func @transform_3(%arg0: i32, %arg1: i32, %arg2: i32) -> (i32, i32) {
    %c0_i32 = arith.constant 0 : i32
    %c0_i32_0 = arith.constant 0 : i32
    return %c0_i32, %arg1 : i32, i32
  }
  func.func @transform_4(%arg0: i32, %arg1: i32, %arg2: i32) -> (i32, i32) {
    %c0_i32 = arith.constant 0 : i32
    return %arg0, %arg1 : i32, i32
  }
}

</mosaic_0001>

<llo_original>
// kernel: tpu_custom_call.1
$region0: #{tpu_custom_call.1}
  #allocation0 [shape = 'u32[]', space=smem, size = 0x4, offset = 0x4, fixed_abs, tag = 'smem constant byte address 0x4 - core index']
  #allocation1 [shape = 'u32[144,128]{1,0:T(1,128)}', space=vmem, size = 0x12000, scoped, tag = 'internal scratch']
  #allocation2 [shape = 'f32[128,8]{1,0:T(8,128)}', space=vmem, size = 0x10000, scoped, tag = 'scratch operand']
  %s0 = inlined_call_operand.vmem [shape: f32[128,64], index: 0, kind: input, shape index: {}]
  %s1 = inlined_call_operand.vmem [shape: f32[64,8], index: 1, kind: input, shape index: {}]
  %s2 = inlined_call_operand.vmem [shape: f32[1,8], index: 2, kind: input, shape index: {}]
  %s3 = inlined_call_operand.vmem [shape: f32[1,8], index: 3, kind: input, shape index: {}]
  %s4 = inlined_call_operand.vmem [shape: f32[128,8], index: 4, kind: output, shape index: {}]
  %s5 = sld [smem:[#allocation0]]
  $region34: #{tpu_custom_call.1} parent=0
    _
  %s7 = ssub.s32 1, %s5
  %s8 = scalar_select 0, %s7, %s5
  // Predicated region
  $region2: #{tpu_custom_call.1} parent=0 // pred_check
    _
  $region3: #{tpu_custom_call.1} parent=0 // pred_check_branch
    %10 = sbr.rel (0) target = $region5
  $region4: #{tpu_custom_call.1} parent=0 // pred_region
    _
  $region5: #{tpu_custom_call.1} parent=0 // pred_fallthru
    _
  // Predicated region
  $region6: #{tpu_custom_call.1} parent=0 // pred_check
    _
  $region7: #{tpu_custom_call.1} parent=0 // pred_check_branch
    %12 = sbr.rel (0) target = $region9
  $region8: #{tpu_custom_call.1} parent=0 // pred_region
    _
  $region9: #{tpu_custom_call.1} parent=0 // pred_fallthru
    _
  // Predicated region
  $region10: #{tpu_custom_call.1} parent=0 // pred_check
    _
  $region11: #{tpu_custom_call.1} parent=0 // pred_check_branch
    %14 = sbr.rel (0) target = $region13
  $region12: #{tpu_custom_call.1} parent=0 // pred_region
    _
  $region13: #{tpu_custom_call.1} parent=0 // pred_fallthru
    _
  // Predicated region
  $region14: #{tpu_custom_call.1} parent=0 // pred_check
    _
  $region15: #{tpu_custom_call.1} parent=0 // pred_check_branch
    %16 = sbr.rel (0) target = $region17
  $region16: #{tpu_custom_call.1} parent=0 // pred_region
    _
  $region17: #{tpu_custom_call.1} parent=0 // pred_fallthru
    _
  %p17 = scmp.eq.s32.totalorder 0, 0
  // Predicated region
  $region18: #{tpu_custom_call.1} parent=0 // pred_check
    %p18 = pneg %p17
  $region19: #{tpu_custom_call.1} parent=0 // pred_check_branch
    %20 = sbr.rel (%p18) target = $region21
  $region20: #{tpu_custom_call.1} parent=0 // pred_region
    %vm21 = vcmask 64512
    %22 = vst.msk [vmem:[#allocation2] sm:$0xff] %vm21, 0.0
    %23 = vst.msk [vmem:[#allocation2 + $0x8] sm:$0xff] %vm21, 0.0
    %24 = vst.msk [vmem:[#allocation2 + $0x10] sm:$0xff] %vm21, 0.0
    %25 = vst.msk [vmem:[#allocation2 + $0x18] sm:$0xff] %vm21, 0.0
    %26 = vst.msk [vmem:[#allocation2 + $0x20] sm:$0xff] %vm21, 0.0
    %27 = vst.msk [vmem:[#allocation2 + $0x28] sm:$0xff] %vm21, 0.0
    %28 = vst.msk [vmem:[#allocation2 + $0x30] sm:$0xff] %vm21, 0.0
    %29 = vst.msk [vmem:[#allocation2 + $0x38] sm:$0xff] %vm21, 0.0
    %30 = vst.msk [vmem:[#allocation2 + $0x40] sm:$0xff] %vm21, 0.0
    %31 = vst.msk [vmem:[#allocation2 + $0x48] sm:$0xff] %vm21, 0.0
    %32 = vst.msk [vmem:[#allocation2 + $0x50] sm:$0xff] %vm21, 0.0
    %33 = vst.msk [vmem:[#allocation2 + $0x58] sm:$0xff] %vm21, 0.0
    %34 = vst.msk [vmem:[#allocation2 + $0x60] sm:$0xff] %vm21, 0.0
    %35 = vst.msk [vmem:[#allocation2 + $0x68] sm:$0xff] %vm21, 0.0
    %36 = vst.msk [vmem:[#allocation2 + $0x70] sm:$0xff] %vm21, 0.0
    %37 = vst.msk [vmem:[#allocation2 + $0x78] sm:$0xff] %vm21, 0.0
  $region21: #{tpu_custom_call.1} parent=0 // pred_fallthru
    _
  %v38 = vld [vmem:[#allocation2] sm:$0xff]
  %v39 = vld [vmem:[#allocation2 + $0x8] sm:$0xff]
  %v40 = vld [vmem:[#allocation2 + $0x10] sm:$0xff]
  %v41 = vld [vmem:[#allocation2 + $0x18] sm:$0xff]
  %v42 = vld [vmem:[#allocation2 + $0x20] sm:$0xff]
  %v43 = vld [vmem:[#allocation2 + $0x28] sm:$0xff]
  %v44 = vld [vmem:[#allocation2 + $0x30] sm:$0xff]
  %v45 = vld [vmem:[#allocation2 + $0x38] sm:$0xff]
  %v46 = vld [vmem:[#allocation2 + $0x40] sm:$0xff]
  %v47 = vld [vmem:[#allocation2 + $0x48] sm:$0xff]
  %v48 = vld [vmem:[#allocation2 + $0x50] sm:$0xff]
  %v49 = vld [vmem:[#allocation2 + $0x58] sm:$0xff]
  %v50 = vld [vmem:[#allocation2 + $0x60] sm:$0xff]
  %v51 = vld [vmem:[#allocation2 + $0x68] sm:$0xff]
  %v52 = vld [vmem:[#allocation2 + $0x70] sm:$0xff]
  %v53 = vld [vmem:[#allocation2 + $0x78] sm:$0xff]
  %v54 = vld [vmem:[%s0] sm:$0xff]
  %v55 = vld [vmem:[%s0 + $0x8] sm:$0xff]
  %v56 = vld [vmem:[%s0 + $0x10] sm:$0xff]
  %v57 = vld [vmem:[%s0 + $0x18] sm:$0xff]
  %v58 = vld [vmem:[%s0 + $0x20] sm:$0xff]
  %v59 = vld [vmem:[%s0 + $0x28] sm:$0xff]
  %v60 = vld [vmem:[%s0 + $0x30] sm:$0xff]
  %v61 = vld [vmem:[%s0 + $0x38] sm:$0xff]
  %v62 = vld [vmem:[%s0 + $0x40] sm:$0xff]
  %v63 = vld [vmem:[%s0 + $0x48] sm:$0xff]
  %v64 = vld [vmem:[%s0 + $0x50] sm:$0xff]
  %v65 = vld [vmem:[%s0 + $0x58] sm:$0xff]
  %v66 = vld [vmem:[%s0 + $0x60] sm:$0xff]
  %v67 = vld [vmem:[%s0 + $0x68] sm:$0xff]
  %v68 = vld [vmem:[%s0 + $0x70] sm:$0xff]
  %v69 = vld [vmem:[%s0 + $0x78] sm:$0xff]
  %v70 = vld [vmem:[%s1] sm:$0xff]
  %v71 = vld [vmem:[%s1 + $0x8] sm:$0xff]
  %v72 = vld [vmem:[%s1 + $0x10] sm:$0xff]
  %v73 = vld [vmem:[%s1 + $0x18] sm:$0xff]
  %v74 = vld [vmem:[%s1 + $0x20] sm:$0xff]
  %v75 = vld [vmem:[%s1 + $0x28] sm:$0xff]
  %v76 = vld [vmem:[%s1 + $0x30] sm:$0xff]
  %v77 = vld [vmem:[%s1 + $0x38] sm:$0xff]
  %vm78 = vcmask 523264
  %v80 = vsel %vm78, %v54, 0
  %v83 = vsel %vm78, %v55, 0
  %v86 = vsel %vm78, %v56, 0
  %v89 = vsel %vm78, %v57, 0
  %v92 = vsel %vm78, %v58, 0
  %v95 = vsel %vm78, %v59, 0
  %v98 = vsel %vm78, %v60, 0
  %v101 = vsel %vm78, %v61, 0
  %v104 = vsel %vm78, %v62, 0
  %v107 = vsel %vm78, %v63, 0
  %v110 = vsel %vm78, %v64, 0
  %v113 = vsel %vm78, %v65, 0
  %v116 = vsel %vm78, %v66, 0
  %v119 = vsel %vm78, %v67, 0
  %v122 = vsel %vm78, %v68, 0
  %v125 = vsel %vm78, %v69, 0
  %127 = vmatprep.subr.mxu0 0.0
  %128 = vmatpush1.msra.mxu0 %v70
  %129 = vmatprep.subr.mxu0 0.0
  %130 = vmatpush1.msra.mxu0 %v71
  %131 = vmatprep.subr.mxu0 0.0
  %132 = vmatpush1.msra.mxu0 %v72
  %133 = vmatprep.subr.mxu0 0.0
  %134 = vmatpush1.msra.mxu0 %v73
  %135 = vmatprep.subr.mxu0 0.0
  %136 = vmatpush1.msra.mxu0 %v74
  %137 = vmatprep.subr.mxu0 0.0
  %138 = vmatpush1.msra.mxu0 %v75
  %139 = vmatprep.subr.mxu0 0.0
  %140 = vmatpush1.msra.mxu0 %v76
  %141 = vmatprep.subr.mxu0 0.0
  %142 = vmatpush1.msra.mxu0 %v77
  %143 = vmatprep.subr.mxu0 0.0
  %144 = vmatpush1.msra.mxu0 0.0
  %145 = vmatprep.subr.mxu0 0.0
  %146 = vmatpush1.msra.mxu0 0.0
  %147 = vmatprep.subr.mxu0 0.0
  %148 = vmatpush1.msra.mxu0 0.0
  %149 = vmatprep.subr.mxu0 0.0
  %150 = vmatpush1.msra.mxu0 0.0
  %151 = vmatprep.subr.mxu0 0.0
  %152 = vmatpush1.msra.mxu0 0.0
  %153 = vmatprep.subr.mxu0 0.0
  %154 = vmatpush1.msra.mxu0 0.0
  %155 = vmatprep.subr.mxu0 0.0
  %156 = vmatpush1.msra.mxu0 0.0
  %157 = vmatprep.subr.mxu0 0.0
  %158 = vmatpush1.msra.mxu0 0.0
  %159 = vmatprep.subr.mxu0 0.0
  %160 = vmatpush1.msra.mxu0 0.0
  %161 = vmatprep.subr.mxu0 0.0
  %162 = vmatpush1.msra.mxu0 0.0
  %163 = vmatprep.subr.mxu0 0.0
  %164 = vmatpush1.msra.mxu0 0.0
  %165 = vmatprep.subr.mxu0 0.0
  %166 = vmatpush1.msra.mxu0 0.0
  %167 = vmatprep.subr.mxu0 0.0
  %168 = vmatpush1.msra.mxu0 0.0
  %169 = vmatprep.subr.mxu0 0.0
  %170 = vmatpush1.msra.mxu0 0.0
  %171 = vmatprep.subr.mxu0 0.0
  %172 = vmatpush1.msra.mxu0 0.0
  %173 = vmatprep.subr.mxu0 0.0
  %174 = vmatpush1.msra.mxu0 0.0
  %175 = vmatprep.subr.mxu0 0.0
  %176 = vmatpush1.msra.mxu0 0.0
  %177 = vmatprep.subr.mxu0 0.0
  %178 = vmatpush1.msra.mxu0 0.0
  %179 = vmatprep.subr.mxu0 0.0
  %180 = vmatpush1.msra.mxu0 0.0
  %181 = vmatprep.subr.mxu0 0.0
  %182 = vmatpush1.msra.mxu0 0.0
  %183 = vmatprep.subr.mxu0 0.0
  %184 = vmatpush1.msra.mxu0 0.0
  %185 = vmatprep.subr.mxu0 0.0
  %186 = vmatpush1.msra.mxu0 0.0
  %187 = vmatprep.subr.mxu0 0.0
  %188 = vmatpush1.msra.mxu0 0.0
  %189 = vmatprep.subr.mxu0 0.0
  %190 = vmatpush1.msra.mxu0 0.0
  %191 = vmatprep.mubr.f32.mxu0 0.0
  %192 = vmatmul.mubr.f32.gmra.mrb[0].mxu0 %v80
  %v193 = vpop.f32.mrb[0].mxu0
  %v194 = vadd.f32 0.0, %v193
  %v195 = vpop.f32.mrb[0].mxu0
  %196 = vmatprep.mubr.f32.mxu0 0.0
  %197 = vmatmul.mubr.f32.gmra.mrb[0].mxu0 %v83
  %v198 = vpop.f32.mrb[0].mxu0
  %v199 = vadd.f32 0.0, %v198
  %v200 = vpop.f32.mrb[0].mxu0
  %201 = vmatprep.mubr.f32.mxu0 0.0
  %202 = vmatmul.mubr.f32.gmra.mrb[0].mxu0 %v86
  %v203 = vpop.f32.mrb[0].mxu0
  %v204 = vadd.f32 0.0, %v203
  %v205 = vpop.f32.mrb[0].mxu0
  %206 = vmatprep.mubr.f32.mxu0 0.0
  %207 = vmatmul.mubr.f32.gmra.mrb[0].mxu0 %v89
  %v208 = vpop.f32.mrb[0].mxu0
  %v209 = vadd.f32 0.0, %v208
  %v210 = vpop.f32.mrb[0].mxu0
  %211 = vmatprep.mubr.f32.mxu0 0.0
  %212 = vmatmul.mubr.f32.gmra.mrb[0].mxu0 %v92
  %v213 = vpop.f32.mrb[0].mxu0
  %v214 = vadd.f32 0.0, %v213
  %v215 = vpop.f32.mrb[0].mxu0
  %216 = vmatprep.mubr.f32.mxu0 0.0
  %217 = vmatmul.mubr.f32.gmra.mrb[0].mxu0 %v95
  %v218 = vpop.f32.mrb[0].mxu0
  %v219 = vadd.f32 0.0, %v218
  %v220 = vpop.f32.mrb[0].mxu0
  %221 = vmatprep.mubr.f32.mxu0 0.0
  %222 = vmatmul.mubr.f32.gmra.mrb[0].mxu0 %v98
  %v223 = vpop.f32.mrb[0].mxu0
  %v224 = vadd.f32 0.0, %v223
  %v225 = vpop.f32.mrb[0].mxu0
  %226 = vmatprep.mubr.f32.mxu0 0.0
  %227 = vmatmul.mubr.f32.gmra.mrb[0].mxu0 %v101
  %v228 = vpop.f32.mrb[0].mxu0
  %v229 = vadd.f32 0.0, %v228
  %v230 = vpop.f32.mrb[0].mxu0
  %231 = vmatprep.mubr.f32.mxu0 0.0
  %232 = vmatmul.mubr.f32.gmra.mrb[0].mxu0 %v104
  %v233 = vpop.f32.mrb[0].mxu0
  %v234 = vadd.f32 0.0, %v233
  %v235 = vpop.f32.mrb[0].mxu0
  %236 = vmatprep.mubr.f32.mxu0 0.0
  %237 = vmatmul.mubr.f32.gmra.mrb[0].mxu0 %v107
  %v238 = vpop.f32.mrb[0].mxu0
  %v239 = vadd.f32 0.0, %v238
  %v240 = vpop.f32.mrb[0].mxu0
  %241 = vmatprep.mubr.f32.mxu0 0.0
  %242 = vmatmul.mubr.f32.gmra.mrb[0].mxu0 %v110
  %v243 = vpop.f32.mrb[0].mxu0
  %v244 = vadd.f32 0.0, %v243
  %v245 = vpop.f32.mrb[0].mxu0
  %246 = vmatprep.mubr.f32.mxu0 0.0
  %247 = vmatmul.mubr.f32.gmra.mrb[0].mxu0 %v113
  %v248 = vpop.f32.mrb[0].mxu0
  %v249 = vadd.f32 0.0, %v248
  %v250 = vpop.f32.mrb[0].mxu0
  %251 = vmatprep.mubr.f32.mxu0 0.0
  %252 = vmatmul.mubr.f32.gmra.mrb[0].mxu0 %v116
  %v253 = vpop.f32.mrb[0].mxu0
  %v254 = vadd.f32 0.0, %v253
  %v255 = vpop.f32.mrb[0].mxu0
  %256 = vmatprep.mubr.f32.mxu0 0.0
  %257 = vmatmul.mubr.f32.gmra.mrb[0].mxu0 %v119
  %v258 = vpop.f32.mrb[0].mxu0
  %v259 = vadd.f32 0.0, %v258
  %v260 = vpop.f32.mrb[0].mxu0
  %261 = vmatprep.mubr.f32.mxu0 0.0
  %262 = vmatmul.mubr.f32.gmra.mrb[0].mxu0 %v122
  %v263 = vpop.f32.mrb[0].mxu0
  %v264 = vadd.f32 0.0, %v263
  %v265 = vpop.f32.mrb[0].mxu0
  %266 = vmatprep.mubr.f32.mxu0 0.0
  %267 = vmatmul.mubr.f32.gmra.mrb[0].mxu0 %v125
  %v268 = vpop.f32.mrb[0].mxu0
  %v269 = vadd.f32 0.0, %v268
  %v270 = vpop.f32.mrb[0].mxu0
  %271 = vdwg.mxu0
  %v272 = vadd.f32 %v38, %v194
  %v273 = vadd.f32 %v39, %v199
  %v274 = vadd.f32 %v40, %v204
  %v275 = vadd.f32 %v41, %v209
  %v276 = vadd.f32 %v42, %v214
  %v277 = vadd.f32 %v43, %v219
  %v278 = vadd.f32 %v44, %v224
  %v279 = vadd.f32 %v45, %v229
  %v280 = vadd.f32 %v46, %v234
  %v281 = vadd.f32 %v47, %v239
  %v282 = vadd.f32 %v48, %v244
  %v283 = vadd.f32 %v49, %v249
  %v284 = vadd.f32 %v50, %v254
  %v285 = vadd.f32 %v51, %v259
  %v286 = vadd.f32 %v52, %v264
  %v287 = vadd.f32 %v53, %v269
  %vm288 = vcmask 64512
  %289 = vst.msk [vmem:[#allocation2] sm:$0xff] %vm288, %v272
  %290 = vst.msk [vmem:[#allocation2 + $0x8] sm:$0xff] %vm288, %v273
  %291 = vst.msk [vmem:[#allocation2 + $0x10] sm:$0xff] %vm288, %v274
  %292 = vst.msk [vmem:[#allocation2 + $0x18] sm:$0xff] %vm288, %v275
  %293 = vst.msk [vmem:[#allocation2 + $0x20] sm:$0xff] %vm288, %v276
  %294 = vst.msk [vmem:[#allocation2 + $0x28] sm:$0xff] %vm288, %v277
  %295 = vst.msk [vmem:[#allocation2 + $0x30] sm:$0xff] %vm288, %v278
  %296 = vst.msk [vmem:[#allocation2 + $0x38] sm:$0xff] %vm288, %v279
  %297 = vst.msk [vmem:[#allocation2 + $0x40] sm:$0xff] %vm288, %v280
  %298 = vst.msk [vmem:[#allocation2 + $0x48] sm:$0xff] %vm288, %v281
  %299 = vst.msk [vmem:[#allocation2 + $0x50] sm:$0xff] %vm288, %v282
  %300 = vst.msk [vmem:[#allocation2 + $0x58] sm:$0xff] %vm288, %v283
  %301 = vst.msk [vmem:[#allocation2 + $0x60] sm:$0xff] %vm288, %v284
  %302 = vst.msk [vmem:[#allocation2 + $0x68] sm:$0xff] %vm288, %v285
  %303 = vst.msk [vmem:[#allocation2 + $0x70] sm:$0xff] %vm288, %v286
  %304 = vst.msk [vmem:[#allocation2 + $0x78] sm:$0xff] %vm288, %v287
  // Predicated region
  $region22: #{tpu_custom_call.1} parent=0 // pred_check
    %p305 = pneg %p17
  $region23: #{tpu_custom_call.1} parent=0 // pred_check_branch
    %307 = sbr.rel (%p305) target = $region25
  $region24: #{tpu_custom_call.1} parent=0 // pred_region
    %v308 = vld [vmem:[#allocation2] sm:$0xff]
    %v309 = vld [vmem:[#allocation2 + $0x8] sm:$0xff]
    %v310 = vld [vmem:[#allocation2 + $0x10] sm:$0xff]
    %v311 = vld [vmem:[#allocation2 + $0x18] sm:$0xff]
    %v312 = vld [vmem:[#allocation2 + $0x20] sm:$0xff]
    %v313 = vld [vmem:[#allocation2 + $0x28] sm:$0xff]
    %v314 = vld [vmem:[#allocation2 + $0x30] sm:$0xff]
    %v315 = vld [vmem:[#allocation2 + $0x38] sm:$0xff]
    %v316 = vld [vmem:[#allocation2 + $0x40] sm:$0xff]
    %v317 = vld [vmem:[#allocation2 + $0x48] sm:$0xff]
    %v318 = vld [vmem:[#allocation2 + $0x50] sm:$0xff]
    %v319 = vld [vmem:[#allocation2 + $0x58] sm:$0xff]
    %v320 = vld [vmem:[#allocation2 + $0x60] sm:$0xff]
    %v321 = vld [vmem:[#allocation2 + $0x68] sm:$0xff]
    %v322 = vld [vmem:[#allocation2 + $0x70] sm:$0xff]
    %v323 = vld [vmem:[#allocation2 + $0x78] sm:$0xff]
    %v324 = vld [vmem:[%s2] sm:$0x1]
    %v326 = vlaneseq
    %v327 = vshrl.u32 %v326, 7
    %v328 = vsub.s32 0, %v327
    %v329 = vrot.slane %v324, %v328
    %v331 = vmul.f32 %v308, %v329
    %v332 = vmul.f32 %v309, %v329
    %v333 = vmul.f32 %v310, %v329
    %v334 = vmul.f32 %v311, %v329
    %v335 = vmul.f32 %v312, %v329
    %v336 = vmul.f32 %v313, %v329
    %v337 = vmul.f32 %v314, %v329
    %v338 = vmul.f32 %v315, %v329
    %v339 = vmul.f32 %v316, %v329
    %v340 = vmul.f32 %v317, %v329
    %v341 = vmul.f32 %v318, %v329
    %v342 = vmul.f32 %v319, %v329
    %v343 = vmul.f32 %v320, %v329
    %v344 = vmul.f32 %v321, %v329
    %v345 = vmul.f32 %v322, %v329
    %v346 = vmul.f32 %v323, %v329
    %v347 = vld [vmem:[%s3] sm:$0x1]
    %v349 = vlaneseq
    %v350 = vshrl.u32 %v349, 7
    %v351 = vsub.s32 0, %v350
    %v352 = vrot.slane %v347, %v351
    %v354 = vadd.f32 %v331, %v352
    %v355 = vadd.f32 %v332, %v352
    %v356 = vadd.f32 %v333, %v352
    %v357 = vadd.f32 %v334, %v352
    %v358 = vadd.f32 %v335, %v352
    %v359 = vadd.f32 %v336, %v352
    %v360 = vadd.f32 %v337, %v352
    %v361 = vadd.f32 %v338, %v352
    %v362 = vadd.f32 %v339, %v352
    %v363 = vadd.f32 %v340, %v352
    %v364 = vadd.f32 %v341, %v352
    %v365 = vadd.f32 %v342, %v352
    %v366 = vadd.f32 %v343, %v352
    %v367 = vadd.f32 %v344, %v352
    %v368 = vadd.f32 %v345, %v352
    %v369 = vadd.f32 %v346, %v352
    %vm370 = vcmp.ge.f32.partialorder %v354, 0.0
    %vm371 = vcmp.ge.f32.partialorder %v355, 0.0
    %vm372 = vcmp.ge.f32.partialorder %v356, 0.0
    %vm373 = vcmp.ge.f32.partialorder %v357, 0.0
    %vm374 = vcmp.ge.f32.partialorder %v358, 0.0
    %vm375 = vcmp.ge.f32.partialorder %v359, 0.0
    %vm376 = vcmp.ge.f32.partialorder %v360, 0.0
    %vm377 = vcmp.ge.f32.partialorder %v361, 0.0
    %vm378 = vcmp.ge.f32.partialorder %v362, 0.0
    %vm379 = vcmp.ge.f32.partialorder %v363, 0.0
    %vm380 = vcmp.ge.f32.partialorder %v364, 0.0
    %vm381 = vcmp.ge.f32.partialorder %v365, 0.0
    %vm382 = vcmp.ge.f32.partialorder %v366, 0.0
    %vm383 = vcmp.ge.f32.partialorder %v367, 0.0
    %vm384 = vcmp.ge.f32.partialorder %v368, 0.0
    %vm385 = vcmp.ge.f32.partialorder %v369, 0.0
    %v386 = vmul.f32 %v354, 0.2
    %v387 = vmul.f32 %v355, 0.2
    %v388 = vmul.f32 %v356, 0.2
    %v389 = vmul.f32 %v357, 0.2
    %v390 = vmul.f32 %v358, 0.2
    %v391 = vmul.f32 %v359, 0.2
    %v392 = vmul.f32 %v360, 0.2
    %v393 = vmul.f32 %v361, 0.2
    %v394 = vmul.f32 %v362, 0.2
    %v395 = vmul.f32 %v363, 0.2
    %v396 = vmul.f32 %v364, 0.2
    %v397 = vmul.f32 %v365, 0.2
    %v398 = vmul.f32 %v366, 0.2
    %v399 = vmul.f32 %v367, 0.2
    %v400 = vmul.f32 %v368, 0.2
    %v401 = vmul.f32 %v369, 0.2
    %v402 = vsel %vm370, %v354, %v386
    %v403 = vsel %vm371, %v355, %v387
    %v404 = vsel %vm372, %v356, %v388
    %v405 = vsel %vm373, %v357, %v389
    %v406 = vsel %vm374, %v358, %v390
    %v407 = vsel %vm375, %v359, %v391
    %v408 = vsel %vm376, %v360, %v392
    %v409 = vsel %vm377, %v361, %v393
    %v410 = vsel %vm378, %v362, %v394
    %v411 = vsel %vm379, %v363, %v395
    %v412 = vsel %vm380, %v364, %v396
    %v413 = vsel %vm381, %v365, %v397
    %v414 = vsel %vm382, %v366, %v398
    %v415 = vsel %vm383, %v367, %v399
    %v416 = vsel %vm384, %v368, %v400
    %v417 = vsel %vm385, %v369, %v401
    %418 = vst.msk [vmem:[%s4] sm:$0xff] %vm288, %v402
    %419 = vst.msk [vmem:[%s4 + $0x8] sm:$0xff] %vm288, %v403
    %420 = vst.msk [vmem:[%s4 + $0x10] sm:$0xff] %vm288, %v404
    %421 = vst.msk [vmem:[%s4 + $0x18] sm:$0xff] %vm288, %v405
    %422 = vst.msk [vmem:[%s4 + $0x20] sm:$0xff] %vm288, %v406
    %423 = vst.msk [vmem:[%s4 + $0x28] sm:$0xff] %vm288, %v407
    %424 = vst.msk [vmem:[%s4 + $0x30] sm:$0xff] %vm288, %v408
    %425 = vst.msk [vmem:[%s4 + $0x38] sm:$0xff] %vm288, %v409
    %426 = vst.msk [vmem:[%s4 + $0x40] sm:$0xff] %vm288, %v410
    %427 = vst.msk [vmem:[%s4 + $0x48] sm:$0xff] %vm288, %v411
    %428 = vst.msk [vmem:[%s4 + $0x50] sm:$0xff] %vm288, %v412
    %429 = vst.msk [vmem:[%s4 + $0x58] sm:$0xff] %vm288, %v413
    %430 = vst.msk [vmem:[%s4 + $0x60] sm:$0xff] %vm288, %v414
    %431 = vst.msk [vmem:[%s4 + $0x68] sm:$0xff] %vm288, %v415
    %432 = vst.msk [vmem:[%s4 + $0x70] sm:$0xff] %vm288, %v416
    %433 = vst.msk [vmem:[%s4 + $0x78] sm:$0xff] %vm288, %v417
  $region25: #{tpu_custom_call.1} parent=0 // pred_fallthru
    _
  // Predicated region
  $region26: #{tpu_custom_call.1} parent=0 // pred_check
    _
  $region27: #{tpu_custom_call.1} parent=0 // pred_check_branch
    %435 = sbr.rel (0) target = $region29
  $region28: #{tpu_custom_call.1} parent=0 // pred_region
    _
  $region29: #{tpu_custom_call.1} parent=0 // pred_fallthru
    _
  // Predicated region
  $region30: #{tpu_custom_call.1} parent=0 // pred_check
    _
  $region31: #{tpu_custom_call.1} parent=0 // pred_check_branch
    %437 = sbr.rel (0) target = $region33
  $region32: #{tpu_custom_call.1} parent=0 // pred_region
    _
  $region33: #{tpu_custom_call.1} parent=0 // pred_fallthru
    _

</llo_original>
